<compile_context>
chip_gen: v5e
topology: v5e:2x2
jax: 0.10.0
libtpu: 0.0.40
codegen_flags: <defaults>
</compile_context>

<pallas_src>
import functools

import jax
import jax.numpy as jnp
from jax import lax
from jax.experimental import pallas as pl
from jax.experimental.pallas import tpu as pltpu

INPUT_DIM = 4      # CartPole-v1 observation space
HIDDEN = 128
OUTPUT_DIM = 2     # CartPole-v1 action space
OUT_ROWS = 8       # Q output rows, padded 2 -> 8 (one sublane tile)

CHUNK = 128        # batch rows (lanes) per in-kernel sub-chunk
TILE_B_MAX = 2048  # batch rows per grid block (a few hundred KB of VMEM)
UNROLL = 4         # cap on the inner fori_loop unroll


def _dqn_kernel(x_ref, w1t_ref, b1_ref, w2t_ref, b2_ref, w3t_ref, b3_ref,
                q_ref, act_ref, *, chunk, num_chunks):
    # Shapes (batch on lanes):
    #   x_ref   (INPUT_DIM, tile_b) f32      w1t_ref (HIDDEN, INPUT_DIM) f32
    #   w2t_ref (HIDDEN, HIDDEN)   mxu dt    w3t_ref (OUT_ROWS, HIDDEN)  mxu dt
    #   b1_ref / b2_ref (HIDDEN, 1) f32      b3_ref  (OUT_ROWS, 1) f32
    #   q_ref   (OUT_ROWS, tile_b) f32       act_ref (1, tile_b) int32
    w1t = w1t_ref[...]
    b1 = b1_ref[...]
    w2t = w2t_ref[...]
    b2 = b2_ref[...]
    w3t = w3t_ref[...]
    b3 = b3_ref[...]
    mxu_dtype = w2t.dtype

    def body(c, carry):
        r = pl.multiple_of(c * chunk, chunk)
        x = x_ref[:, pl.ds(r, chunk)]                        # (4, chunk) f32

        # fc1: K=4 contraction is far too shallow for the MXU -> 4 VPU
        # rank-1 FMAs (column of w1t broadcast along lanes, row of x along
        # sublanes).
        h1 = w1t[:, 0:1] * x[0:1, :]
        for k in range(1, INPUT_DIM):
            h1 = h1 + w1t[:, k:k + 1] * x[k:k + 1, :]
        h1 = jnp.maximum(h1 + b1, 0.0)                       # (128, chunk) f32

        # fc2: 128x128 MXU matmul (bf16 operands by default), f32 accumulate.
        h2 = jnp.dot(w2t, h1.astype(mxu_dtype),
                     preferred_element_type=jnp.float32)
        h2 = jnp.maximum(h2 + b2, 0.0)                       # (128, chunk) f32

        # fc3: only OUT_ROWS=8 output rows (rows >= 2 have zero weights/bias).
        q = jnp.dot(w3t, h2.astype(mxu_dtype),
                    preferred_element_type=jnp.float32) + b3  # (8, chunk) f32
        q_ref[:, pl.ds(r, chunk)] = q.astype(q_ref.dtype)

        # Fused greedy-action selection over the 2 real Q rows.
        act_ref[:, pl.ds(r, chunk)] = (q[1:2, :] > q[0:1, :]).astype(jnp.int32)
        return carry

    lax.fori_loop(0, num_chunks, body, 0, unroll=min(num_chunks, UNROLL))


def dqn_forward(x, params, *, mxu_dtype=jnp.bfloat16, return_actions=False):
    """DQN MLP forward pass.

    x: (B, INPUT_DIM) float observations.
    Returns (B, OUTPUT_DIM) Q-values (and, if return_actions, (B,) int32
    greedy actions). mxu_dtype: bf16 (default; native MXU format on
    v5e/v6e/v7x) or f32 for an exact path; accumulation is f32 either way.
    """
    B = x.shape[0]
    f32 = jnp.float32

    # Re-lay-out parameters for the batch-on-lanes kernel (tiny one-time ops).
    w1t = params["w1"].astype(f32).T                              # (128, 4)
    b1c = params["b1"].astype(f32).reshape(HIDDEN, 1)             # (128, 1)
    w2t = params["w2"].astype(mxu_dtype).T                        # (128, 128)
    b2c = params["b2"].astype(f32).reshape(HIDDEN, 1)             # (128, 1)
    w3t = jnp.zeros((OUT_ROWS, HIDDEN), mxu_dtype).at[:OUTPUT_DIM, :].set(
        params["w3"].astype(mxu_dtype).T)                         # (8, 128)
    b3c = jnp.zeros((OUT_ROWS, 1), f32).at[:OUTPUT_DIM, :].set(
        params["b3"].astype(f32).reshape(OUTPUT_DIM, 1))          # (8, 1)

    # Batch tiling: batch is the lane axis -> pad to a multiple of CHUNK, then
    # spread chunks evenly over >= 2 grid blocks (v7x dual-TC) with at most
    # TILE_B_MAX rows per block.
    b_pad = -(-B // CHUNK) * CHUNK
    n_chunks = b_pad // CHUNK
    max_chunks = TILE_B_MAX // CHUNK
    if n_chunks <= 1:
        chunks_per_tile = 1
    else:
        n_blocks = max(2, -(-n_chunks // max_chunks))
        chunks_per_tile = -(-n_chunks // n_blocks)
    tile_b = chunks_per_tile * CHUNK
    b_total = -(-b_pad // tile_b) * tile_b
    grid = (b_total // tile_b,)

    xt = jnp.zeros((INPUT_DIM, b_total), f32).at[:, :B].set(x.astype(f32).T)

    kernel = functools.partial(_dqn_kernel, chunk=CHUNK,
                               num_chunks=chunks_per_tile)
    const = lambda shape: pl.BlockSpec(shape, lambda i: (0,) * len(shape))

    q_all, act_all = pl.pallas_call(
        kernel,
        out_shape=(
            jax.ShapeDtypeStruct((OUT_ROWS, b_total), jnp.float32),
            jax.ShapeDtypeStruct((1, b_total), jnp.int32),
        ),
        grid=grid,
        in_specs=[
            pl.BlockSpec((INPUT_DIM, tile_b), lambda i: (0, i)),   # x per-block
            const((HIDDEN, INPUT_DIM)), const((HIDDEN, 1)),        # fc1 resident
            const((HIDDEN, HIDDEN)), const((HIDDEN, 1)),           # fc2 resident
            const((OUT_ROWS, HIDDEN)), const((OUT_ROWS, 1)),       # fc3 resident
        ],
        out_specs=(
            pl.BlockSpec((OUT_ROWS, tile_b), lambda i: (0, i)),    # Q slab
            pl.BlockSpec((1, tile_b), lambda i: (0, i)),           # actions
        ),
        compiler_params=pltpu.CompilerParams(
            dimension_semantics=("parallel",)),                    # v7x: 2 TCs
    )(xt, w1t, b1c, w2t, b2c, w3t, b3c)

    q = q_all[:OUTPUT_DIM, :B].T          # 8 B/row re-read; trivial
    if return_actions:
        return q, act_all[0, :B]
    return q


def init_params(key):
    """Deterministic init mimicking torch.nn.Linear default U[-1/sqrt(fan_in), +]."""
    ks = jax.random.split(key, 6)

    def linear(kw, kb, fan_in, fan_out):
        bound = 1.0 / jnp.sqrt(jnp.float32(fan_in))
        # stored as (in, out) so the reference does x @ W
        w = jax.random.uniform(kw, (fan_in, fan_out), jnp.float32, -bound, bound)
        b = jax.random.uniform(kb, (1, fan_out), jnp.float32, -bound, bound)
        return w, b

    w1, b1 = linear(ks[0], ks[1], INPUT_DIM, HIDDEN)
    w2, b2 = linear(ks[2], ks[3], HIDDEN, HIDDEN)
    w3, b3 = linear(ks[4], ks[5], HIDDEN, OUTPUT_DIM)
    return {"w1": w1, "b1": b1, "w2": w2, "b2": b2, "w3": w3, "b3": b3}


def reference_forward(x, p):
    h1 = jnp.maximum(x @ p["w1"] + p["b1"], 0.0)
    h2 = jnp.maximum(h1 @ p["w2"] + p["b2"], 0.0)
    return h2 @ p["w3"] + p["b3"]


if __name__ == "__main__":
    key = jax.random.PRNGKey(0)
    kx, kp = jax.random.split(key)
    params = init_params(kp)

    # Small online action-selection batch (f32 exact path + fused argmax).
    B = 8
    x = jax.random.normal(kx, (B, INPUT_DIM), jnp.float32)
    q, act = dqn_forward(x, params, mxu_dtype=jnp.float32, return_actions=True)
    q = jax.block_until_ready(q)
    ref = reference_forward(x, params)
    assert q.shape == (B, OUTPUT_DIM)
    assert jnp.allclose(q, ref, atol=1e-3, rtol=1e-3), "f32 mismatch (small B)"
    assert jnp.array_equal(act, jnp.argmax(q, axis=-1)), "argmax mismatch"

    # Replay-buffer style batch: exercises the multi-block grid, row padding
    # and the in-block sub-chunk loop.
    B2 = 1000
    x2 = jax.random.normal(jax.random.PRNGKey(1), (B2, INPUT_DIM), jnp.float32)
    q2 = jax.block_until_ready(dqn_forward(x2, params, mxu_dtype=jnp.float32))
    ref2 = reference_forward(x2, params)
    assert q2.shape == (B2, OUTPUT_DIM)
    assert jnp.allclose(q2, ref2, atol=1e-3, rtol=1e-3), "f32 mismatch (large B)"

    # Default path: bf16 MXU operands, f32 accumulation -> loose tolerance.
    q_bf = jax.block_until_ready(dqn_forward(x2, params))
    assert q_bf.shape == (B2, OUTPUT_DIM)
    assert jnp.allclose(q_bf, ref2, atol=5e-2, rtol=5e-2), "bf16 mismatch"

    print("KERNEL_OK")
</pallas_src>

<mosaic_0001>
module attributes {stable_mosaic.version = 11 : i64} {
  func.func @_dqn_kernel(%arg0: i32, %arg1: memref<4x128xf32, #tpu.memory_space<vmem>>, %arg2: memref<128x4xf32, #tpu.memory_space<vmem>>, %arg3: memref<128x1xf32, #tpu.memory_space<vmem>>, %arg4: memref<128x128xf32, #tpu.memory_space<vmem>>, %arg5: memref<128x1xf32, #tpu.memory_space<vmem>>, %arg6: memref<8x128xf32, #tpu.memory_space<vmem>>, %arg7: memref<8x1xf32, #tpu.memory_space<vmem>>, %arg8: memref<8x128xf32, #tpu.memory_space<vmem>>, %arg9: memref<1x128xi32, #tpu.memory_space<vmem>>) attributes {dimension_semantics = [#tpu.dimension_semantics<parallel>], iteration_bounds = array<i64: 1>, scalar_prefetch = 0 : i64, scratch_operands = 0 : i64, tpu.core_type = #tpu.core_type<tc>, window_params = [{transform_indices = @transform_0, window_bounds = array<i64: 4, 128>}, {pipeline_mode = #tpu.pipeline_mode<synchronous>, transform_indices = @transform_1, window_bounds = array<i64: 128, 4>}, {pipeline_mode = #tpu.pipeline_mode<synchronous>, transform_indices = @transform_2, window_bounds = array<i64: 128, 1>}, {pipeline_mode = #tpu.pipeline_mode<synchronous>, transform_indices = @transform_3, window_bounds = array<i64: 128, 128>}, {pipeline_mode = #tpu.pipeline_mode<synchronous>, transform_indices = @transform_4, window_bounds = array<i64: 128, 1>}, {pipeline_mode = #tpu.pipeline_mode<synchronous>, transform_indices = @transform_5, window_bounds = array<i64: 8, 128>}, {pipeline_mode = #tpu.pipeline_mode<synchronous>, transform_indices = @transform_6, window_bounds = array<i64: 8, 1>}, {transform_indices = @transform_7, window_bounds = array<i64: 8, 128>}, {transform_indices = @transform_8, window_bounds = array<i64: 1, 128>}]} {
    %c0 = arith.constant 0 : index
    %c0_0 = arith.constant 0 : index
    %0 = vector.load %arg2[%c0, %c0_0] : memref<128x4xf32, #tpu.memory_space<vmem>>, vector<128x4xf32>
    %c0_1 = arith.constant 0 : index
    %c0_2 = arith.constant 0 : index
    %1 = vector.load %arg3[%c0_1, %c0_2] : memref<128x1xf32, #tpu.memory_space<vmem>>, vector<128x1xf32>
    %c0_3 = arith.constant 0 : index
    %c0_4 = arith.constant 0 : index
    %2 = vector.load %arg4[%c0_3, %c0_4] : memref<128x128xf32, #tpu.memory_space<vmem>>, vector<128x128xf32>
    %c0_5 = arith.constant 0 : index
    %c0_6 = arith.constant 0 : index
    %3 = vector.load %arg5[%c0_5, %c0_6] : memref<128x1xf32, #tpu.memory_space<vmem>>, vector<128x1xf32>
    %c0_7 = arith.constant 0 : index
    %c0_8 = arith.constant 0 : index
    %4 = vector.load %arg6[%c0_7, %c0_8] : memref<8x128xf32, #tpu.memory_space<vmem>>, vector<8x128xf32>
    %c0_9 = arith.constant 0 : index
    %c0_10 = arith.constant 0 : index
    %5 = vector.load %arg7[%c0_9, %c0_10] : memref<8x1xf32, #tpu.memory_space<vmem>>, vector<8x1xf32>
    %c0_i32 = arith.constant 0 : i32
    %c128_i32 = arith.constant 128 : i32
    %6 = arith.muli %c0_i32, %c128_i32 : i32
    %7 = tpu.assume_multiple %6, 128 : i32
    %c0_11 = arith.constant 0 : index
    %8 = arith.index_cast %7 : i32 to index
    %9 = vector.load %arg1[%c0_11, %8] : memref<4x128xf32, #tpu.memory_space<vmem>>, vector<4x128xf32>
    %10 = vector.extract_strided_slice %0 {offsets = [0, 0], sizes = [128, 1], strides = [1, 1]} : vector<128x4xf32> to vector<128x1xf32>
    %11 = vector.extract_strided_slice %9 {offsets = [0, 0], sizes = [1, 128], strides = [1, 1]} : vector<4x128xf32> to vector<1x128xf32>
    %12 = vector.broadcast %10 : vector<128x1xf32> to vector<128x128xf32>
    %13 = vector.broadcast %11 : vector<1x128xf32> to vector<128x128xf32>
    %14 = arith.mulf %12, %13 : vector<128x128xf32>
    %15 = vector.extract_strided_slice %0 {offsets = [0, 1], sizes = [128, 1], strides = [1, 1]} : vector<128x4xf32> to vector<128x1xf32>
    %16 = vector.extract_strided_slice %9 {offsets = [1, 0], sizes = [1, 128], strides = [1, 1]} : vector<4x128xf32> to vector<1x128xf32>
    %17 = vector.broadcast %15 : vector<128x1xf32> to vector<128x128xf32>
    %18 = vector.broadcast %16 : vector<1x128xf32> to vector<128x128xf32>
    %19 = arith.mulf %17, %18 : vector<128x128xf32>
    %20 = arith.addf %14, %19 : vector<128x128xf32>
    %21 = vector.extract_strided_slice %0 {offsets = [0, 2], sizes = [128, 1], strides = [1, 1]} : vector<128x4xf32> to vector<128x1xf32>
    %22 = vector.extract_strided_slice %9 {offsets = [2, 0], sizes = [1, 128], strides = [1, 1]} : vector<4x128xf32> to vector<1x128xf32>
    %23 = vector.broadcast %21 : vector<128x1xf32> to vector<128x128xf32>
    %24 = vector.broadcast %22 : vector<1x128xf32> to vector<128x128xf32>
    %25 = arith.mulf %23, %24 : vector<128x128xf32>
    %26 = arith.addf %20, %25 : vector<128x128xf32>
    %27 = vector.extract_strided_slice %0 {offsets = [0, 3], sizes = [128, 1], strides = [1, 1]} : vector<128x4xf32> to vector<128x1xf32>
    %28 = vector.extract_strided_slice %9 {offsets = [3, 0], sizes = [1, 128], strides = [1, 1]} : vector<4x128xf32> to vector<1x128xf32>
    %29 = vector.broadcast %27 : vector<128x1xf32> to vector<128x128xf32>
    %30 = vector.broadcast %28 : vector<1x128xf32> to vector<128x128xf32>
    %31 = arith.mulf %29, %30 : vector<128x128xf32>
    %32 = arith.addf %26, %31 : vector<128x128xf32>
    %33 = vector.broadcast %1 : vector<128x1xf32> to vector<128x128xf32>
    %34 = arith.addf %32, %33 : vector<128x128xf32>
    %cst = arith.constant 0.000000e+00 : f32
    %35 = vector.broadcast %cst : f32 to vector<128x128xf32>
    %36 = arith.maximumf %34, %35 : vector<128x128xf32>
    %cst_12 = arith.constant dense<0.000000e+00> : vector<128x128xf32>
    %37 = tpu.matmul %2, %36, %cst_12 {dimension_numbers = #tpu.dot_dimension_numbers<[1], [0], [0], [1], [0, 0, 1, 1], [], []>} : vector<128x128xf32>, vector<128x128xf32>, vector<128x128xf32> -> vector<128x128xf32>
    %38 = vector.broadcast %3 : vector<128x1xf32> to vector<128x128xf32>
    %39 = arith.addf %37, %38 : vector<128x128xf32>
    %cst_13 = arith.constant 0.000000e+00 : f32
    %40 = vector.broadcast %cst_13 : f32 to vector<128x128xf32>
    %41 = arith.maximumf %39, %40 : vector<128x128xf32>
    %cst_14 = arith.constant dense<0.000000e+00> : vector<8x128xf32>
    %42 = tpu.matmul %4, %41, %cst_14 {dimension_numbers = #tpu.dot_dimension_numbers<[1], [0], [0], [1], [0, 0, 1, 1], [], []>} : vector<8x128xf32>, vector<128x128xf32>, vector<8x128xf32> -> vector<8x128xf32>
    %43 = vector.broadcast %5 : vector<8x1xf32> to vector<8x128xf32>
    %44 = arith.addf %42, %43 : vector<8x128xf32>
    %c0_15 = arith.constant 0 : index
    %45 = arith.index_cast %7 : i32 to index
    %46 = vector.load %arg8[%c0_15, %45] : memref<8x128xf32, #tpu.memory_space<vmem>>, vector<8x128xf32>
    tpu.vector_store %arg8[%c0_15, %45], %44 {strides = array<i32>} : memref<8x128xf32, #tpu.memory_space<vmem>>, vector<8x128xf32>,
    %47 = vector.extract_strided_slice %44 {offsets = [1, 0], sizes = [1, 128], strides = [1, 1]} : vector<8x128xf32> to vector<1x128xf32>
    %48 = vector.extract_strided_slice %44 {offsets = [0, 0], sizes = [1, 128], strides = [1, 1]} : vector<8x128xf32> to vector<1x128xf32>
    %49 = arith.cmpf ogt, %47, %48 : vector<1x128xf32>
    %50 = arith.extui %49 : vector<1x128xi1> to vector<1x128xi32>
    %c0_16 = arith.constant 0 : index
    %51 = arith.index_cast %7 : i32 to index
    %52 = vector.load %arg9[%c0_16, %51] : memref<1x128xi32, #tpu.memory_space<vmem>>, vector<1x128xi32>
    tpu.vector_store %arg9[%c0_16, %51], %50 {strides = array<i32>} : memref<1x128xi32, #tpu.memory_space<vmem>>, vector<1x128xi32>,
    %c1_i32 = arith.constant 1 : i32
    return
  }
  func.func @transform_0(%arg0: i32) -> (i32, i32) {
    %c0_i32 = arith.constant 0 : i32
    %c0_i32_0 = arith.constant 0 : i32
    return %c0_i32, %arg0 : i32, i32
  }
  func.func @transform_1(%arg0: i32) -> (i32, i32) {
    %c0_i32 = arith.constant 0 : i32
    %c0_i32_0 = arith.constant 0 : i32
    %c0_i32_1 = arith.constant 0 : i32
    return %c0_i32, %c0_i32_0 : i32, i32
  }
  func.func @transform_2(%arg0: i32) -> (i32, i32) {
    %c0_i32 = arith.constant 0 : i32
    %c0_i32_0 = arith.constant 0 : i32
    %c0_i32_1 = arith.constant 0 : i32
    return %c0_i32, %c0_i32_0 : i32, i32
  }
  func.func @transform_3(%arg0: i32) -> (i32, i32) {
    %c0_i32 = arith.constant 0 : i32
    %c0_i32_0 = arith.constant 0 : i32
    %c0_i32_1 = arith.constant 0 : i32
    return %c0_i32, %c0_i32_0 : i32, i32
  }
  func.func @transform_4(%arg0: i32) -> (i32, i32) {
    %c0_i32 = arith.constant 0 : i32
    %c0_i32_0 = arith.constant 0 : i32
    %c0_i32_1 = arith.constant 0 : i32
    return %c0_i32, %c0_i32_0 : i32, i32
  }
  func.func @transform_5(%arg0: i32) -> (i32, i32) {
    %c0_i32 = arith.constant 0 : i32
    %c0_i32_0 = arith.constant 0 : i32
    %c0_i32_1 = arith.constant 0 : i32
    return %c0_i32, %c0_i32_0 : i32, i32
  }
  func.func @transform_6(%arg0: i32) -> (i32, i32) {
    %c0_i32 = arith.constant 0 : i32
    %c0_i32_0 = arith.constant 0 : i32
    %c0_i32_1 = arith.constant 0 : i32
    return %c0_i32, %c0_i32_0 : i32, i32
  }
  func.func @transform_7(%arg0: i32) -> (i32, i32) {
    %c0_i32 = arith.constant 0 : i32
    %c0_i32_0 = arith.constant 0 : i32
    return %c0_i32, %arg0 : i32, i32
  }
  func.func @transform_8(%arg0: i32) -> (i32, i32) {
    %c0_i32 = arith.constant 0 : i32
    %c0_i32_0 = arith.constant 0 : i32
    return %c0_i32, %arg0 : i32, i32
  }
}

</mosaic_0001>

<llo_original>
// kernel: tpu_custom_call.1
$region0: #{tpu_custom_call.1}
  #allocation0 [shape = 'u32[]', space=smem, size = 0x4, offset = 0x4, fixed_abs, tag = 'smem constant byte address 0x4 - core index']
  #allocation1 [shape = 'u32[72,128]{1,0:T(1,128)}', space=vmem, size = 0x9000, scoped, tag = 'internal scratch']
  %s0 = inlined_call_operand.vmem [shape: f32[4,128], index: 0, kind: input, shape index: {}]
  %s1 = inlined_call_operand.vmem [shape: f32[128,4], index: 1, kind: input, shape index: {}]
  %s2 = inlined_call_operand.vmem [shape: f32[128,1], index: 2, kind: input, shape index: {}]
  %s3 = inlined_call_operand.vmem [shape: f32[128,128], index: 3, kind: input, shape index: {}]
  %s4 = inlined_call_operand.vmem [shape: f32[128,1], index: 4, kind: input, shape index: {}]
  %s5 = inlined_call_operand.vmem [shape: f32[8,128], index: 5, kind: input, shape index: {}]
  %s6 = inlined_call_operand.vmem [shape: f32[8,1], index: 6, kind: input, shape index: {}]
  %s7 = inlined_call_operand.hbm [shape: f32[8,128], index: 7, kind: output, shape index: {0}]
  %s8 = inlined_call_operand.hbm [shape: s32[1,128], index: 8, kind: output, shape index: {1}]
  %9 = xla_tuple %s7, %s8
  %s10 = sld [smem:[#allocation0]]
  $region46: #{tpu_custom_call.1} parent=0
    _
  %s12 = ssub.s32 1, %s10
  %s13 = scalar_select 0, %s12, %s10
  $region1: #{tpu_custom_call.1} parent=0
    #allocation2 [shape = 'u8[4096]{0}', space=vmem, size = 0x1000, scoped, tag = 'output window, operand 0, single buffered']
    #allocation3 [shape = 's32[1]{0}', space=sflag, size = 0x4, scoped, tag = 'scoped memory for tpu_custom_call.1']
    #allocation4 [shape = 'u8[512]{0}', space=vmem, size = 0x400, scoped, tag = 'output window, operand 1, single buffered']
    #allocation5 [shape = 's32[1]{0}', space=sflag, size = 0x4, scoped, tag = 'scoped memory for tpu_custom_call.1']
    %14 = vsyncpa [#allocation3], 0
    %15 = vsyncpa [#allocation5], 0
    // Predicated region
    $region2: #{tpu_custom_call.1} parent=1 // pred_check
      _
    $region3: #{tpu_custom_call.1} parent=1 // pred_check_branch
      %17 = sbr.rel (0) target = $region5
    $region4: #{tpu_custom_call.1} parent=1 // pred_region
      _
    $region5: #{tpu_custom_call.1} parent=1 // pred_fallthru
      _
    // Predicated region
    $region6: #{tpu_custom_call.1} parent=1 // pred_check
      _
    $region7: #{tpu_custom_call.1} parent=1 // pred_check_branch
      %19 = sbr.rel (0) target = $region9
    $region8: #{tpu_custom_call.1} parent=1 // pred_region
      _
    $region9: #{tpu_custom_call.1} parent=1 // pred_fallthru
      _
    // Predicated region
    $region10: #{tpu_custom_call.1} parent=1 // pred_check
      _
    $region11: #{tpu_custom_call.1} parent=1 // pred_check_branch
      %21 = sbr.rel (0) target = $region13
    $region12: #{tpu_custom_call.1} parent=1 // pred_region
      _
    $region13: #{tpu_custom_call.1} parent=1 // pred_fallthru
      _
    // Predicated region
    $region14: #{tpu_custom_call.1} parent=1 // pred_check
      _
    $region15: #{tpu_custom_call.1} parent=1 // pred_check_branch
      %23 = sbr.rel (0) target = $region17
    $region16: #{tpu_custom_call.1} parent=1 // pred_region
      _
    $region17: #{tpu_custom_call.1} parent=1 // pred_fallthru
      _
    // Predicated region
    $region18: #{tpu_custom_call.1} parent=1 // pred_check
      _
    $region19: #{tpu_custom_call.1} parent=1 // pred_check_branch
      %25 = sbr.rel (0) target = $region21
    $region20: #{tpu_custom_call.1} parent=1 // pred_region
      _
    $region21: #{tpu_custom_call.1} parent=1 // pred_fallthru
      _
    // Predicated region
    $region22: #{tpu_custom_call.1} parent=1 // pred_check
      _
    $region23: #{tpu_custom_call.1} parent=1 // pred_check_branch
      %27 = sbr.rel (0) target = $region25
    $region24: #{tpu_custom_call.1} parent=1 // pred_region
      _
    $region25: #{tpu_custom_call.1} parent=1 // pred_fallthru
      _
    // Predicated region
    $region26: #{tpu_custom_call.1} parent=1 // pred_check
      _
    $region27: #{tpu_custom_call.1} parent=1 // pred_check_branch
      %29 = sbr.rel (0) target = $region29
    $region28: #{tpu_custom_call.1} parent=1 // pred_region
      _
    $region29: #{tpu_custom_call.1} parent=1 // pred_fallthru
      _
    %v30 = vld [vmem:[%s1] sm:$0xff]
    %v31 = vld [vmem:[%s1 + $0x8] sm:$0xff]
    %v32 = vld [vmem:[%s1 + $0x10] sm:$0xff]
    %v33 = vld [vmem:[%s1 + $0x18] sm:$0xff]
    %v34 = vld [vmem:[%s1 + $0x20] sm:$0xff]
    %v35 = vld [vmem:[%s1 + $0x28] sm:$0xff]
    %v36 = vld [vmem:[%s1 + $0x30] sm:$0xff]
    %v37 = vld [vmem:[%s1 + $0x38] sm:$0xff]
    %v38 = vld [vmem:[%s1 + $0x40] sm:$0xff]
    %v39 = vld [vmem:[%s1 + $0x48] sm:$0xff]
    %v40 = vld [vmem:[%s1 + $0x50] sm:$0xff]
    %v41 = vld [vmem:[%s1 + $0x58] sm:$0xff]
    %v42 = vld [vmem:[%s1 + $0x60] sm:$0xff]
    %v43 = vld [vmem:[%s1 + $0x68] sm:$0xff]
    %v44 = vld [vmem:[%s1 + $0x70] sm:$0xff]
    %v45 = vld [vmem:[%s1 + $0x78] sm:$0xff]
    %v46 = vld [vmem:[%s2] sm:$0xff]
    %v47 = vld [vmem:[%s2 + $0x8] sm:$0xff]
    %v48 = vld [vmem:[%s2 + $0x10] sm:$0xff]
    %v49 = vld [vmem:[%s2 + $0x18] sm:$0xff]
    %v50 = vld [vmem:[%s2 + $0x20] sm:$0xff]
    %v51 = vld [vmem:[%s2 + $0x28] sm:$0xff]
    %v52 = vld [vmem:[%s2 + $0x30] sm:$0xff]
    %v53 = vld [vmem:[%s2 + $0x38] sm:$0xff]
    %v54 = vld [vmem:[%s2 + $0x40] sm:$0xff]
    %v55 = vld [vmem:[%s2 + $0x48] sm:$0xff]
    %v56 = vld [vmem:[%s2 + $0x50] sm:$0xff]
    %v57 = vld [vmem:[%s2 + $0x58] sm:$0xff]
    %v58 = vld [vmem:[%s2 + $0x60] sm:$0xff]
    %v59 = vld [vmem:[%s2 + $0x68] sm:$0xff]
    %v60 = vld [vmem:[%s2 + $0x70] sm:$0xff]
    %v61 = vld [vmem:[%s2 + $0x78] sm:$0xff]
    %v62 = vld [vmem:[%s3] sm:$0xff]
    %v63 = vld [vmem:[%s3 + $0x8] sm:$0xff]
    %v64 = vld [vmem:[%s3 + $0x10] sm:$0xff]
    %v65 = vld [vmem:[%s3 + $0x18] sm:$0xff]
    %v66 = vld [vmem:[%s3 + $0x20] sm:$0xff]
    %v67 = vld [vmem:[%s3 + $0x28] sm:$0xff]
    %v68 = vld [vmem:[%s3 + $0x30] sm:$0xff]
    %v69 = vld [vmem:[%s3 + $0x38] sm:$0xff]
    %v70 = vld [vmem:[%s3 + $0x40] sm:$0xff]
    %v71 = vld [vmem:[%s3 + $0x48] sm:$0xff]
    %v72 = vld [vmem:[%s3 + $0x50] sm:$0xff]
    %v73 = vld [vmem:[%s3 + $0x58] sm:$0xff]
    %v74 = vld [vmem:[%s3 + $0x60] sm:$0xff]
    %v75 = vld [vmem:[%s3 + $0x68] sm:$0xff]
    %v76 = vld [vmem:[%s3 + $0x70] sm:$0xff]
    %v77 = vld [vmem:[%s3 + $0x78] sm:$0xff]
    %v78 = vld [vmem:[%s4] sm:$0xff]
    %v79 = vld [vmem:[%s4 + $0x8] sm:$0xff]
    %v80 = vld [vmem:[%s4 + $0x10] sm:$0xff]
    %v81 = vld [vmem:[%s4 + $0x18] sm:$0xff]
    %v82 = vld [vmem:[%s4 + $0x20] sm:$0xff]
    %v83 = vld [vmem:[%s4 + $0x28] sm:$0xff]
    %v84 = vld [vmem:[%s4 + $0x30] sm:$0xff]
    %v85 = vld [vmem:[%s4 + $0x38] sm:$0xff]
    %v86 = vld [vmem:[%s4 + $0x40] sm:$0xff]
    %v87 = vld [vmem:[%s4 + $0x48] sm:$0xff]
    %v88 = vld [vmem:[%s4 + $0x50] sm:$0xff]
    %v89 = vld [vmem:[%s4 + $0x58] sm:$0xff]
    %v90 = vld [vmem:[%s4 + $0x60] sm:$0xff]
    %v91 = vld [vmem:[%s4 + $0x68] sm:$0xff]
    %v92 = vld [vmem:[%s4 + $0x70] sm:$0xff]
    %v93 = vld [vmem:[%s4 + $0x78] sm:$0xff]
    %v94 = vld [vmem:[%s5] sm:$0xff]
    %v95 = vld [vmem:[%s6] sm:$0xff]
    %v96 = vld [vmem:[%s0] sm:$0xf]
    %98 = vset.pattern.permute.xlu0 0
    %99 = vperm.xlu0 %98, %v30
    %v100 = vpop.permute.xlu0 %99
    %103 = vset.pattern.permute.xlu0 0
    %104 = vperm.xlu0 %103, %v31
    %v105 = vpop.permute.xlu0 %104
    %108 = vset.pattern.permute.xlu0 0
    %109 = vperm.xlu0 %108, %v32
    %v110 = vpop.permute.xlu0 %109
    %113 = vset.pattern.permute.xlu0 0
    %114 = vperm.xlu0 %113, %v33
    %v115 = vpop.permute.xlu0 %114
    %118 = vset.pattern.permute.xlu0 0
    %119 = vperm.xlu0 %118, %v34
    %v120 = vpop.permute.xlu0 %119
    %123 = vset.pattern.permute.xlu0 0
    %124 = vperm.xlu0 %123, %v35
    %v125 = vpop.permute.xlu0 %124
    %128 = vset.pattern.permute.xlu0 0
    %129 = vperm.xlu0 %128, %v36
    %v130 = vpop.permute.xlu0 %129
    %133 = vset.pattern.permute.xlu0 0
    %134 = vperm.xlu0 %133, %v37
    %v135 = vpop.permute.xlu0 %134
    %138 = vset.pattern.permute.xlu0 0
    %139 = vperm.xlu0 %138, %v38
    %v140 = vpop.permute.xlu0 %139
    %143 = vset.pattern.permute.xlu0 0
    %144 = vperm.xlu0 %143, %v39
    %v145 = vpop.permute.xlu0 %144
    %148 = vset.pattern.permute.xlu0 0
    %149 = vperm.xlu0 %148, %v40
    %v150 = vpop.permute.xlu0 %149
    %153 = vset.pattern.permute.xlu0 0
    %154 = vperm.xlu0 %153, %v41
    %v155 = vpop.permute.xlu0 %154
    %158 = vset.pattern.permute.xlu0 0
    %159 = vperm.xlu0 %158, %v42
    %v160 = vpop.permute.xlu0 %159
    %163 = vset.pattern.permute.xlu0 0
    %164 = vperm.xlu0 %163, %v43
    %v165 = vpop.permute.xlu0 %164
    %168 = vset.pattern.permute.xlu0 0
    %169 = vperm.xlu0 %168, %v44
    %v170 = vpop.permute.xlu0 %169
    %173 = vset.pattern.permute.xlu0 0
    %174 = vperm.xlu0 %173, %v45
    %v175 = vpop.permute.xlu0 %174
    %v177 = vperm.slane %v96, 0
    %v178 = vmul.f32 %v100, %v177
    %v179 = vmul.f32 %v105, %v177
    %v180 = vmul.f32 %v110, %v177
    %v181 = vmul.f32 %v115, %v177
    %v182 = vmul.f32 %v120, %v177
    %v183 = vmul.f32 %v125, %v177
    %v184 = vmul.f32 %v130, %v177
    %v185 = vmul.f32 %v135, %v177
    %v186 = vmul.f32 %v140, %v177
    %v187 = vmul.f32 %v145, %v177
    %v188 = vmul.f32 %v150, %v177
    %v189 = vmul.f32 %v155, %v177
    %v190 = vmul.f32 %v160, %v177
    %v191 = vmul.f32 %v165, %v177
    %v192 = vmul.f32 %v170, %v177
    %v193 = vmul.f32 %v175, %v177
    %194 = vset.pattern.permute.xlu0 1
    %195 = vperm.xlu0 %194, %v30
    %v196 = vpop.permute.xlu0 %195
    %198 = vset.pattern.permute.xlu0 1
    %199 = vperm.xlu0 %198, %v31
    %v200 = vpop.permute.xlu0 %199
    %202 = vset.pattern.permute.xlu0 1
    %203 = vperm.xlu0 %202, %v32
    %v204 = vpop.permute.xlu0 %203
    %206 = vset.pattern.permute.xlu0 1
    %207 = vperm.xlu0 %206, %v33
    %v208 = vpop.permute.xlu0 %207
    %210 = vset.pattern.permute.xlu0 1
    %211 = vperm.xlu0 %210, %v34
    %v212 = vpop.permute.xlu0 %211
    %214 = vset.pattern.permute.xlu0 1
    %215 = vperm.xlu0 %214, %v35
    %v216 = vpop.permute.xlu0 %215
    %218 = vset.pattern.permute.xlu0 1
    %219 = vperm.xlu0 %218, %v36
    %v220 = vpop.permute.xlu0 %219
    %222 = vset.pattern.permute.xlu0 1
    %223 = vperm.xlu0 %222, %v37
    %v224 = vpop.permute.xlu0 %223
    %226 = vset.pattern.permute.xlu0 1
    %227 = vperm.xlu0 %226, %v38
    %v228 = vpop.permute.xlu0 %227
    %230 = vset.pattern.permute.xlu0 1
    %231 = vperm.xlu0 %230, %v39
    %v232 = vpop.permute.xlu0 %231
    %234 = vset.pattern.permute.xlu0 1
    %235 = vperm.xlu0 %234, %v40
    %v236 = vpop.permute.xlu0 %235
    %238 = vset.pattern.permute.xlu0 1
    %239 = vperm.xlu0 %238, %v41
    %v240 = vpop.permute.xlu0 %239
    %242 = vset.pattern.permute.xlu0 1
    %243 = vperm.xlu0 %242, %v42
    %v244 = vpop.permute.xlu0 %243
    %246 = vset.pattern.permute.xlu0 1
    %247 = vperm.xlu0 %246, %v43
    %v248 = vpop.permute.xlu0 %247
    %250 = vset.pattern.permute.xlu0 1
    %251 = vperm.xlu0 %250, %v44
    %v252 = vpop.permute.xlu0 %251
    %254 = vset.pattern.permute.xlu0 1
    %255 = vperm.xlu0 %254, %v45
    %v256 = vpop.permute.xlu0 %255
    %v258 = vperm.slane %v96, 1
    %v259 = vmul.f32 %v196, %v258
    %v260 = vmul.f32 %v200, %v258
    %v261 = vmul.f32 %v204, %v258
    %v262 = vmul.f32 %v208, %v258
    %v263 = vmul.f32 %v212, %v258
    %v264 = vmul.f32 %v216, %v258
    %v265 = vmul.f32 %v220, %v258
    %v266 = vmul.f32 %v224, %v258
    %v267 = vmul.f32 %v228, %v258
    %v268 = vmul.f32 %v232, %v258
    %v269 = vmul.f32 %v236, %v258
    %v270 = vmul.f32 %v240, %v258
    %v271 = vmul.f32 %v244, %v258
    %v272 = vmul.f32 %v248, %v258
    %v273 = vmul.f32 %v252, %v258
    %v274 = vmul.f32 %v256, %v258
    %v275 = vadd.f32 %v178, %v259
    %v276 = vadd.f32 %v179, %v260
    %v277 = vadd.f32 %v180, %v261
    %v278 = vadd.f32 %v181, %v262
    %v279 = vadd.f32 %v182, %v263
    %v280 = vadd.f32 %v183, %v264
    %v281 = vadd.f32 %v184, %v265
    %v282 = vadd.f32 %v185, %v266
    %v283 = vadd.f32 %v186, %v267
    %v284 = vadd.f32 %v187, %v268
    %v285 = vadd.f32 %v188, %v269
    %v286 = vadd.f32 %v189, %v270
    %v287 = vadd.f32 %v190, %v271
    %v288 = vadd.f32 %v191, %v272
    %v289 = vadd.f32 %v192, %v273
    %v290 = vadd.f32 %v193, %v274
    %291 = vset.pattern.permute.xlu0 2
    %292 = vperm.xlu0 %291, %v30
    %v293 = vpop.permute.xlu0 %292
    %295 = vset.pattern.permute.xlu0 2
    %296 = vperm.xlu0 %295, %v31
    %v297 = vpop.permute.xlu0 %296
    %299 = vset.pattern.permute.xlu0 2
    %300 = vperm.xlu0 %299, %v32
    %v301 = vpop.permute.xlu0 %300
    %303 = vset.pattern.permute.xlu0 2
    %304 = vperm.xlu0 %303, %v33
    %v305 = vpop.permute.xlu0 %304
    %307 = vset.pattern.permute.xlu0 2
    %308 = vperm.xlu0 %307, %v34
    %v309 = vpop.permute.xlu0 %308
    %311 = vset.pattern.permute.xlu0 2
    %312 = vperm.xlu0 %311, %v35
    %v313 = vpop.permute.xlu0 %312
    %315 = vset.pattern.permute.xlu0 2
    %316 = vperm.xlu0 %315, %v36
    %v317 = vpop.permute.xlu0 %316
    %319 = vset.pattern.permute.xlu0 2
    %320 = vperm.xlu0 %319, %v37
    %v321 = vpop.permute.xlu0 %320
    %323 = vset.pattern.permute.xlu0 2
    %324 = vperm.xlu0 %323, %v38
    %v325 = vpop.permute.xlu0 %324
    %327 = vset.pattern.permute.xlu0 2
    %328 = vperm.xlu0 %327, %v39
    %v329 = vpop.permute.xlu0 %328
    %331 = vset.pattern.permute.xlu0 2
    %332 = vperm.xlu0 %331, %v40
    %v333 = vpop.permute.xlu0 %332
    %335 = vset.pattern.permute.xlu0 2
    %336 = vperm.xlu0 %335, %v41
    %v337 = vpop.permute.xlu0 %336
    %339 = vset.pattern.permute.xlu0 2
    %340 = vperm.xlu0 %339, %v42
    %v341 = vpop.permute.xlu0 %340
    %343 = vset.pattern.permute.xlu0 2
    %344 = vperm.xlu0 %343, %v43
    %v345 = vpop.permute.xlu0 %344
    %347 = vset.pattern.permute.xlu0 2
    %348 = vperm.xlu0 %347, %v44
    %v349 = vpop.permute.xlu0 %348
    %351 = vset.pattern.permute.xlu0 2
    %352 = vperm.xlu0 %351, %v45
    %v353 = vpop.permute.xlu0 %352
    %v355 = vperm.slane %v96, 2
    %v356 = vmul.f32 %v293, %v355
    %v357 = vmul.f32 %v297, %v355
    %v358 = vmul.f32 %v301, %v355
    %v359 = vmul.f32 %v305, %v355
    %v360 = vmul.f32 %v309, %v355
    %v361 = vmul.f32 %v313, %v355
    %v362 = vmul.f32 %v317, %v355
    %v363 = vmul.f32 %v321, %v355
    %v364 = vmul.f32 %v325, %v355
    %v365 = vmul.f32 %v329, %v355
    %v366 = vmul.f32 %v333, %v355
    %v367 = vmul.f32 %v337, %v355
    %v368 = vmul.f32 %v341, %v355
    %v369 = vmul.f32 %v345, %v355
    %v370 = vmul.f32 %v349, %v355
    %v371 = vmul.f32 %v353, %v355
    %v372 = vadd.f32 %v275, %v356
    %v373 = vadd.f32 %v276, %v357
    %v374 = vadd.f32 %v277, %v358
    %v375 = vadd.f32 %v278, %v359
    %v376 = vadd.f32 %v279, %v360
    %v377 = vadd.f32 %v280, %v361
    %v378 = vadd.f32 %v281, %v362
    %v379 = vadd.f32 %v282, %v363
    %v380 = vadd.f32 %v283, %v364
    %v381 = vadd.f32 %v284, %v365
    %v382 = vadd.f32 %v285, %v366
    %v383 = vadd.f32 %v286, %v367
    %v384 = vadd.f32 %v287, %v368
    %v385 = vadd.f32 %v288, %v369
    %v386 = vadd.f32 %v289, %v370
    %v387 = vadd.f32 %v290, %v371
    %388 = vset.pattern.permute.xlu0 3
    %389 = vperm.xlu0 %388, %v30
    %v390 = vpop.permute.xlu0 %389
    %392 = vset.pattern.permute.xlu0 3
    %393 = vperm.xlu0 %392, %v31
    %v394 = vpop.permute.xlu0 %393
    %396 = vset.pattern.permute.xlu0 3
    %397 = vperm.xlu0 %396, %v32
    %v398 = vpop.permute.xlu0 %397
    %400 = vset.pattern.permute.xlu0 3
    %401 = vperm.xlu0 %400, %v33
    %v402 = vpop.permute.xlu0 %401
    %404 = vset.pattern.permute.xlu0 3
    %405 = vperm.xlu0 %404, %v34
    %v406 = vpop.permute.xlu0 %405
    %408 = vset.pattern.permute.xlu0 3
    %409 = vperm.xlu0 %408, %v35
    %v410 = vpop.permute.xlu0 %409
    %412 = vset.pattern.permute.xlu0 3
    %413 = vperm.xlu0 %412, %v36
    %v414 = vpop.permute.xlu0 %413
    %416 = vset.pattern.permute.xlu0 3
    %417 = vperm.xlu0 %416, %v37
    %v418 = vpop.permute.xlu0 %417
    %420 = vset.pattern.permute.xlu0 3
    %421 = vperm.xlu0 %420, %v38
    %v422 = vpop.permute.xlu0 %421
    %424 = vset.pattern.permute.xlu0 3
    %425 = vperm.xlu0 %424, %v39
    %v426 = vpop.permute.xlu0 %425
    %428 = vset.pattern.permute.xlu0 3
    %429 = vperm.xlu0 %428, %v40
    %v430 = vpop.permute.xlu0 %429
    %432 = vset.pattern.permute.xlu0 3
    %433 = vperm.xlu0 %432, %v41
    %v434 = vpop.permute.xlu0 %433
    %436 = vset.pattern.permute.xlu0 3
    %437 = vperm.xlu0 %436, %v42
    %v438 = vpop.permute.xlu0 %437
    %440 = vset.pattern.permute.xlu0 3
    %441 = vperm.xlu0 %440, %v43
    %v442 = vpop.permute.xlu0 %441
    %444 = vset.pattern.permute.xlu0 3
    %445 = vperm.xlu0 %444, %v44
    %v446 = vpop.permute.xlu0 %445
    %448 = vset.pattern.permute.xlu0 3
    %449 = vperm.xlu0 %448, %v45
    %v450 = vpop.permute.xlu0 %449
    %v452 = vperm.slane %v96, 3
    %v453 = vmul.f32 %v390, %v452
    %v454 = vmul.f32 %v394, %v452
    %v455 = vmul.f32 %v398, %v452
    %v456 = vmul.f32 %v402, %v452
    %v457 = vmul.f32 %v406, %v452
    %v458 = vmul.f32 %v410, %v452
    %v459 = vmul.f32 %v414, %v452
    %v460 = vmul.f32 %v418, %v452
    %v461 = vmul.f32 %v422, %v452
    %v462 = vmul.f32 %v426, %v452
    %v463 = vmul.f32 %v430, %v452
    %v464 = vmul.f32 %v434, %v452
    %v465 = vmul.f32 %v438, %v452
    %v466 = vmul.f32 %v442, %v452
    %v467 = vmul.f32 %v446, %v452
    %v468 = vmul.f32 %v450, %v452
    %v469 = vadd.f32 %v372, %v453
    %v470 = vadd.f32 %v373, %v454
    %v471 = vadd.f32 %v374, %v455
    %v472 = vadd.f32 %v375, %v456
    %v473 = vadd.f32 %v376, %v457
    %v474 = vadd.f32 %v377, %v458
    %v475 = vadd.f32 %v378, %v459
    %v476 = vadd.f32 %v379, %v460
    %v477 = vadd.f32 %v380, %v461
    %v478 = vadd.f32 %v381, %v462
    %v479 = vadd.f32 %v382, %v463
    %v480 = vadd.f32 %v383, %v464
    %v481 = vadd.f32 %v384, %v465
    %v482 = vadd.f32 %v385, %v466
    %v483 = vadd.f32 %v386, %v467
    %v484 = vadd.f32 %v387, %v468
    %486 = vset.pattern.permute.xlu0 0
    %487 = vperm.xlu0 %486, %v46
    %v488 = vpop.permute.xlu0 %487
    %491 = vset.pattern.permute.xlu0 0
    %492 = vperm.xlu0 %491, %v47
    %v493 = vpop.permute.xlu0 %492
    %496 = vset.pattern.permute.xlu0 0
    %497 = vperm.xlu0 %496, %v48
    %v498 = vpop.permute.xlu0 %497
    %501 = vset.pattern.permute.xlu0 0
    %502 = vperm.xlu0 %501, %v49
    %v503 = vpop.permute.xlu0 %502
    %506 = vset.pattern.permute.xlu0 0
    %507 = vperm.xlu0 %506, %v50
    %v508 = vpop.permute.xlu0 %507
    %511 = vset.pattern.permute.xlu0 0
    %512 = vperm.xlu0 %511, %v51
    %v513 = vpop.permute.xlu0 %512
    %516 = vset.pattern.permute.xlu0 0
    %517 = vperm.xlu0 %516, %v52
    %v518 = vpop.permute.xlu0 %517
    %521 = vset.pattern.permute.xlu0 0
    %522 = vperm.xlu0 %521, %v53
    %v523 = vpop.permute.xlu0 %522
    %526 = vset.pattern.permute.xlu0 0
    %527 = vperm.xlu0 %526, %v54
    %v528 = vpop.permute.xlu0 %527
    %531 = vset.pattern.permute.xlu0 0
    %532 = vperm.xlu0 %531, %v55
    %v533 = vpop.permute.xlu0 %532
    %536 = vset.pattern.permute.xlu0 0
    %537 = vperm.xlu0 %536, %v56
    %v538 = vpop.permute.xlu0 %537
    %541 = vset.pattern.permute.xlu0 0
    %542 = vperm.xlu0 %541, %v57
    %v543 = vpop.permute.xlu0 %542
    %546 = vset.pattern.permute.xlu0 0
    %547 = vperm.xlu0 %546, %v58
    %v548 = vpop.permute.xlu0 %547
    %551 = vset.pattern.permute.xlu0 0
    %552 = vperm.xlu0 %551, %v59
    %v553 = vpop.permute.xlu0 %552
    %556 = vset.pattern.permute.xlu0 0
    %557 = vperm.xlu0 %556, %v60
    %v558 = vpop.permute.xlu0 %557
    %561 = vset.pattern.permute.xlu0 0
    %562 = vperm.xlu0 %561, %v61
    %v563 = vpop.permute.xlu0 %562
    %v565 = vadd.f32 %v469, %v488
    %v566 = vadd.f32 %v470, %v493
    %v567 = vadd.f32 %v471, %v498
    %v568 = vadd.f32 %v472, %v503
    %v569 = vadd.f32 %v473, %v508
    %v570 = vadd.f32 %v474, %v513
    %v571 = vadd.f32 %v475, %v518
    %v572 = vadd.f32 %v476, %v523
    %v573 = vadd.f32 %v477, %v528
    %v574 = vadd.f32 %v478, %v533
    %v575 = vadd.f32 %v479, %v538
    %v576 = vadd.f32 %v480, %v543
    %v577 = vadd.f32 %v481, %v548
    %v578 = vadd.f32 %v482, %v553
    %v579 = vadd.f32 %v483, %v558
    %v580 = vadd.f32 %v484, %v563
    %v581 = vmax.f32 %v565, 0.0
    %v582 = vmax.f32 %v566, 0.0
    %v583 = vmax.f32 %v567, 0.0
    %v584 = vmax.f32 %v568, 0.0
    %v585 = vmax.f32 %v569, 0.0
    %v586 = vmax.f32 %v570, 0.0
    %v587 = vmax.f32 %v571, 0.0
    %v588 = vmax.f32 %v572, 0.0
    %v589 = vmax.f32 %v573, 0.0
    %v590 = vmax.f32 %v574, 0.0
    %v591 = vmax.f32 %v575, 0.0
    %v592 = vmax.f32 %v576, 0.0
    %v593 = vmax.f32 %v577, 0.0
    %v594 = vmax.f32 %v578, 0.0
    %v595 = vmax.f32 %v579, 0.0
    %v596 = vmax.f32 %v580, 0.0
    %598 = vset.pattern.permute.xlu0 0
    %599 = vperm.xlu0 %598, %v78
    %v600 = vpop.permute.xlu0 %599
    %603 = vset.pattern.permute.xlu0 0
    %604 = vperm.xlu0 %603, %v79
    %v605 = vpop.permute.xlu0 %604
    %608 = vset.pattern.permute.xlu0 0
    %609 = vperm.xlu0 %608, %v80
    %v610 = vpop.permute.xlu0 %609
    %613 = vset.pattern.permute.xlu0 0
    %614 = vperm.xlu0 %613, %v81
    %v615 = vpop.permute.xlu0 %614
    %618 = vset.pattern.permute.xlu0 0
    %619 = vperm.xlu0 %618, %v82
    %v620 = vpop.permute.xlu0 %619
    %623 = vset.pattern.permute.xlu0 0
    %624 = vperm.xlu0 %623, %v83
    %v625 = vpop.permute.xlu0 %624
    %628 = vset.pattern.permute.xlu0 0
    %629 = vperm.xlu0 %628, %v84
    %v630 = vpop.permute.xlu0 %629
    %633 = vset.pattern.permute.xlu0 0
    %634 = vperm.xlu0 %633, %v85
    %v635 = vpop.permute.xlu0 %634
    %638 = vset.pattern.permute.xlu0 0
    %639 = vperm.xlu0 %638, %v86
    %v640 = vpop.permute.xlu0 %639
    %643 = vset.pattern.permute.xlu0 0
    %644 = vperm.xlu0 %643, %v87
    %v645 = vpop.permute.xlu0 %644
    %648 = vset.pattern.permute.xlu0 0
    %649 = vperm.xlu0 %648, %v88
    %v650 = vpop.permute.xlu0 %649
    %653 = vset.pattern.permute.xlu0 0
    %654 = vperm.xlu0 %653, %v89
    %v655 = vpop.permute.xlu0 %654
    %658 = vset.pattern.permute.xlu0 0
    %659 = vperm.xlu0 %658, %v90
    %v660 = vpop.permute.xlu0 %659
    %663 = vset.pattern.permute.xlu0 0
    %664 = vperm.xlu0 %663, %v91
    %v665 = vpop.permute.xlu0 %664
    %668 = vset.pattern.permute.xlu0 0
    %669 = vperm.xlu0 %668, %v92
    %v670 = vpop.permute.xlu0 %669
    %673 = vset.pattern.permute.xlu0 0
    %674 = vperm.xlu0 %673, %v93
    %v675 = vpop.permute.xlu0 %674
    %677 = vmatpush.msra.mxu0 %v596
    %678 = vmatpush.msra.mxu0 %v595
    %679 = vmatpush.msra.mxu0 %v594
    %680 = vmatpush.msra.mxu0 %v593
    %681 = vmatpush.msra.mxu0 %v592
    %682 = vmatpush.msra.mxu0 %v591
    %683 = vmatpush.msra.mxu0 %v590
    %684 = vmatpush.msra.mxu0 %v589
    %685 = vmatpush.msra.mxu0 %v588
    %686 = vmatpush.msra.mxu0 %v587
    %687 = vmatpush.msra.mxu0 %v586
    %688 = vmatpush.msra.mxu0 %v585
    %689 = vmatpush.msra.mxu0 %v584
    %690 = vmatpush.msra.mxu0 %v583
    %691 = vmatpush.msra.mxu0 %v582
    %692 = vmatpush.msra.mxu0 %v581
    %693 = vmatmul.f32.gmra.mxu0 %v62
    %v694 = vpop.f32.mrf.mxu0
    %v695 = vadd.f32 %v600, %v694
    %696 = vmatmul.f32.gmra.mxu0 %v63
    %v697 = vpop.f32.mrf.mxu0
    %v698 = vadd.f32 %v605, %v697
    %699 = vmatmul.f32.gmra.mxu0 %v64
    %v700 = vpop.f32.mrf.mxu0
    %v701 = vadd.f32 %v610, %v700
    %702 = vmatmul.f32.gmra.mxu0 %v65
    %v703 = vpop.f32.mrf.mxu0
    %v704 = vadd.f32 %v615, %v703
    %705 = vmatmul.f32.gmra.mxu0 %v66
    %v706 = vpop.f32.mrf.mxu0
    %v707 = vadd.f32 %v620, %v706
    %708 = vmatmul.f32.gmra.mxu0 %v67
    %v709 = vpop.f32.mrf.mxu0
    %v710 = vadd.f32 %v625, %v709
    %711 = vmatmul.f32.gmra.mxu0 %v68
    %v712 = vpop.f32.mrf.mxu0
    %v713 = vadd.f32 %v630, %v712
    %714 = vmatmul.f32.gmra.mxu0 %v69
    %v715 = vpop.f32.mrf.mxu0
    %v716 = vadd.f32 %v635, %v715
    %717 = vmatmul.f32.gmra.mxu0 %v70
    %v718 = vpop.f32.mrf.mxu0
    %v719 = vadd.f32 %v640, %v718
    %720 = vmatmul.f32.gmra.mxu0 %v71
    %v721 = vpop.f32.mrf.mxu0
    %v722 = vadd.f32 %v645, %v721
    %723 = vmatmul.f32.gmra.mxu0 %v72
    %v724 = vpop.f32.mrf.mxu0
    %v725 = vadd.f32 %v650, %v724
    %726 = vmatmul.f32.gmra.mxu0 %v73
    %v727 = vpop.f32.mrf.mxu0
    %v728 = vadd.f32 %v655, %v727
    %729 = vmatmul.f32.gmra.mxu0 %v74
    %v730 = vpop.f32.mrf.mxu0
    %v731 = vadd.f32 %v660, %v730
    %732 = vmatmul.f32.gmra.mxu0 %v75
    %v733 = vpop.f32.mrf.mxu0
    %v734 = vadd.f32 %v665, %v733
    %735 = vmatmul.f32.gmra.mxu0 %v76
    %v736 = vpop.f32.mrf.mxu0
    %v737 = vadd.f32 %v670, %v736
    %738 = vmatmul.f32.gmra.mxu0 %v77
    %v739 = vpop.f32.mrf.mxu0
    %v740 = vadd.f32 %v675, %v739
    %741 = vdwg.mxu0
    %v742 = vmax.f32 %v695, 0.0
    %v743 = vmax.f32 %v698, 0.0
    %v744 = vmax.f32 %v701, 0.0
    %v745 = vmax.f32 %v704, 0.0
    %v746 = vmax.f32 %v707, 0.0
    %v747 = vmax.f32 %v710, 0.0
    %v748 = vmax.f32 %v713, 0.0
    %v749 = vmax.f32 %v716, 0.0
    %v750 = vmax.f32 %v719, 0.0
    %v751 = vmax.f32 %v722, 0.0
    %v752 = vmax.f32 %v725, 0.0
    %v753 = vmax.f32 %v728, 0.0
    %v754 = vmax.f32 %v731, 0.0
    %v755 = vmax.f32 %v734, 0.0
    %v756 = vmax.f32 %v737, 0.0
    %v757 = vmax.f32 %v740, 0.0
    %759 = vset.pattern.permute.xlu0 0
    %760 = vperm.xlu0 %759, %v95
    %v761 = vpop.permute.xlu0 %760
    %763 = vmatpush.msra.mxu0 %v757
    %764 = vmatpush.msra.mxu0 %v756
    %765 = vmatpush.msra.mxu0 %v755
    %766 = vmatpush.msra.mxu0 %v754
    %767 = vmatpush.msra.mxu0 %v753
    %768 = vmatpush.msra.mxu0 %v752
    %769 = vmatpush.msra.mxu0 %v751
    %770 = vmatpush.msra.mxu0 %v750
    %771 = vmatpush.msra.mxu0 %v749
    %772 = vmatpush.msra.mxu0 %v748
    %773 = vmatpush.msra.mxu0 %v747
    %774 = vmatpush.msra.mxu0 %v746
    %775 = vmatpush.msra.mxu0 %v745
    %776 = vmatpush.msra.mxu0 %v744
    %777 = vmatpush.msra.mxu0 %v743
    %778 = vmatpush.msra.mxu0 %v742
    %779 = vmatmul.f32.gmra.mxu0 %v94
    %v780 = vpop.f32.mrf.mxu0
    %v781 = vadd.f32 %v761, %v780
    %782 = vdwg.mxu0
    %783 = vst [vmem:[#allocation2] sm:$0xff] %v781
    %v785 = vrot.slane %v781, 7
    %vm787 = vcmp.gt.f32.partialorder %v781, %v785
    %v788 = vsel %vm787, 1, 0
    %789 = vst [vmem:[#allocation4 - $0x1] sm:$0x2] %v788
    // Predicated region
    $region30: #{tpu_custom_call.1} parent=1 // pred_check
      _
    $region31: #{tpu_custom_call.1} parent=1 // pred_check_branch
      %791 = sbr.rel (0) target = $region33
    $region32: #{tpu_custom_call.1} parent=1 // pred_region
      %793 = vsyncadd [#allocation3], 0
      %s795 = sshll.u32 [#allocation2], 4
      %s796 = int_to_ptr.vmem [resolvable:$true] %s795
      %s797 = sshll.u32 %s7, 4
      %s798 = int_to_ptr.hbm [resolvable:$true] %s797
      %800 = dma.vmem_to_hbm [thread:$0]  %s796, 128, %s798, [#allocation3]
    $region33: #{tpu_custom_call.1} parent=1 // pred_fallthru
      _
    // Predicated region
    $region34: #{tpu_custom_call.1} parent=1 // pred_check
      _
    $region35: #{tpu_custom_call.1} parent=1 // pred_check_branch
      %802 = sbr.rel (0) target = $region37
    $region36: #{tpu_custom_call.1} parent=1 // pred_region
      %804 = vsyncadd [#allocation5], 0
      %s806 = sshll.u32 [#allocation4], 4
      %s807 = int_to_ptr.vmem [resolvable:$true] %s806
      %s808 = sshll.u32 %s8, 4
      %s809 = int_to_ptr.hbm [resolvable:$true] %s808
      %811 = dma.vmem_to_hbm [thread:$0]  %s807, 16, %s809, [#allocation5]
    $region37: #{tpu_custom_call.1} parent=1 // pred_fallthru
      _
    // Predicated region
    $region38: #{tpu_custom_call.1} parent=1 // pred_check
      _
    $region39: #{tpu_custom_call.1} parent=1 // pred_check_branch
      %813 = sbr.rel (0) target = $region41
    $region40: #{tpu_custom_call.1} parent=1 // pred_region
      %815 = dma.done [#allocation3], 128
    $region41: #{tpu_custom_call.1} parent=1 // pred_fallthru
      _
    // Predicated region
    $region42: #{tpu_custom_call.1} parent=1 // pred_check
      _
    $region43: #{tpu_custom_call.1} parent=1 // pred_check_branch
      %817 = sbr.rel (0) target = $region45
    $region44: #{tpu_custom_call.1} parent=1 // pred_region
      %819 = dma.done [#allocation5], 16
    $region45: #{tpu_custom_call.1} parent=1 // pred_fallthru
      _
    %820 = vsyncpa [#allocation3], 1
    %821 = vsyncpa [#allocation5], 1

</llo_original>
